<compile_context>
chip_gen: v5e
topology: v5e:2x2
jax: 0.10.0
libtpu: 0.0.40
codegen_flags: <defaults>
</compile_context>

<pallas_src>
import jax
import jax.numpy as jnp
import numpy as np
from jax import lax
from jax.experimental import pallas as pl
from jax.experimental.pallas import tpu as pltpu


# ----------------------------------------------------------------------------
# Fused kernel: per-relation GraphConv (or loop_trans fallback) + online
# softmax attention over the relation grid axis.
# ----------------------------------------------------------------------------
def _hetero_gcn_query_kernel(edge_flags_ref,            # SMEM (R,) int32 (prefetch)
                             adj_ref,                    # (1, tn, N) bf16  A[r, dst_tile, src]
                             xs_ref,                     # (N, H)  f32  all src features
                             xd_ref,                     # (tn, H) f32  dst-tile features
                             ron_ref,                    # (1, N, 1)  rsqrt(out_deg[r])
                             rin_ref,                    # (1, tn, 1) rsqrt(in_deg[r, tile])
                             wg_ref, wl_ref, bg_ref,     # per-relation GraphConv params
                             wlt_ref, blt_ref,           # HeteroGraphConv.loop_trans
                             wq_ref, bq_ref, wa_ref,     # Attention('query')
                             out_ref,                    # (tn, H) f32
                             rel_sc, m_sc, l_sc, acc_sc):
    r = pl.program_id(1)

    @pl.when(r == 0)
    def _init():
        m_sc[...] = jnp.full(m_sc.shape, -jnp.inf, jnp.float32)
        l_sc[...] = jnp.zeros(l_sc.shape, jnp.float32)
        acc_sc[...] = jnp.zeros(acc_sc.shape, jnp.float32)

    has_edges = edge_flags_ref[r] > 0

    @pl.when(has_edges)
    def _graph_conv():
        adj = adj_ref[0].astype(jnp.float32)           # (tn, N); 0/1 exact in bf16
        feat_src = xs_ref[...] * ron_ref[0]            # (N, H) * (N, 1)
        h = jnp.dot(adj, feat_src, preferred_element_type=jnp.float32)   # (tn, H)
        # row-scaling by rsqrt(in_deg) commutes with the right matmul
        h = h * rin_ref[0]
        rel_sc[...] = (jnp.dot(h, wg_ref[0], preferred_element_type=jnp.float32)
                       + jnp.dot(xd_ref[...], wl_ref[0],
                                 preferred_element_type=jnp.float32)
                       + bg_ref[0])

    @pl.when(jnp.logical_not(has_edges))
    def _loop_trans():
        rel_sc[...] = (jnp.dot(xd_ref[...], wlt_ref[...],
                               preferred_element_type=jnp.float32)
                       + blt_ref[...])

    # ---- Attention('query') as an online softmax over the relation axis ----
    e = rel_sc[...]                                                      # (tn, H)
    hq = jnp.tanh(jnp.dot(e, wq_ref[...], preferred_element_type=jnp.float32)
                  + bq_ref[...])                                         # (tn, Dq)
    # score via VPU multiply + lane reduce instead of a 1-lane-wide MXU matmul
    s = jnp.sum(hq * wa_ref[...], axis=-1, keepdims=True)                # (tn, 1)

    m_prev = m_sc[...]
    m_new = jnp.maximum(m_prev, s)
    alpha = jnp.exp(m_prev - m_new)
    p = jnp.exp(s - m_new)
    l_sc[...] = alpha * l_sc[...] + p
    acc_sc[...] = alpha * acc_sc[...] + p * e
    m_sc[...] = m_new

    @pl.when(r == pl.num_programs(1) - 1)
    def _finalize():
        # exact divide (approx reciprocal would perturb vs. the torch reference)
        out_ref[...] = acc_sc[...] / l_sc[...]


# ----------------------------------------------------------------------------
# Wrapper
# ----------------------------------------------------------------------------
def hetero_graph_conv(adj, x, params, *, row_tile=256):
    """adj: (R, N, N) f32 dense dst-x-src adjacency per relation.
       x:   (N, H) f32 node features.
       returns: (N, H) f32."""
    R, N, _ = adj.shape
    H = x.shape[1]
    Dq = params["w_q"].shape[1]

    tn = N if N <= row_tile else row_tile
    assert N % tn == 0, "node count must be divisible by the dst-row tile"
    num_tiles = N // tn

    # Relation-level reductions done once in XLA (not per grid step in-kernel).
    edge_flags = (jnp.sum(adj, axis=(1, 2)) > 0).astype(jnp.int32)          # (R,)
    r_out = lax.rsqrt(jnp.maximum(jnp.sum(adj, axis=1), 1.0))[..., None]    # (R, N, 1) per src
    r_in = lax.rsqrt(jnp.maximum(jnp.sum(adj, axis=2), 1.0))[..., None]     # (R, N, 1) per dst

    # 0/1 adjacency is exact in bf16 -> half the HBM bytes for the dominant input.
    adj_bf16 = adj.astype(jnp.bfloat16)

    wa_row = params["w_a"].reshape(1, Dq)     # row layout for the VPU score reduce

    kernel = pl.pallas_call(
        _hetero_gcn_query_kernel,
        out_shape=jax.ShapeDtypeStruct((N, H), jnp.float32),
        grid_spec=pltpu.PrefetchScalarGridSpec(
            num_scalar_prefetch=1,
            grid=(num_tiles, R),
            in_specs=[
                pl.BlockSpec((1, tn, N), lambda i, r, ef: (r, i, 0)),   # adj (bf16)
                pl.BlockSpec((N, H), lambda i, r, ef: (0, 0)),          # x (all src)
                pl.BlockSpec((tn, H), lambda i, r, ef: (i, 0)),         # x (dst tile)
                pl.BlockSpec((1, N, 1), lambda i, r, ef: (r, 0, 0)),    # rsqrt out_deg
                pl.BlockSpec((1, tn, 1), lambda i, r, ef: (r, i, 0)),   # rsqrt in_deg
                pl.BlockSpec((1, H, H), lambda i, r, ef: (r, 0, 0)),    # W_gcn[r]
                pl.BlockSpec((1, H, H), lambda i, r, ef: (r, 0, 0)),    # W_loop[r]
                pl.BlockSpec((1, 1, H), lambda i, r, ef: (r, 0, 0)),    # b_gcn[r]
                pl.BlockSpec((H, H), lambda i, r, ef: (0, 0)),          # W_lt
                pl.BlockSpec((1, H), lambda i, r, ef: (0, 0)),          # b_lt
                pl.BlockSpec((H, Dq), lambda i, r, ef: (0, 0)),         # W_q
                pl.BlockSpec((1, Dq), lambda i, r, ef: (0, 0)),         # b_q
                pl.BlockSpec((1, Dq), lambda i, r, ef: (0, 0)),         # w_a (row)
            ],
            out_specs=pl.BlockSpec((tn, H), lambda i, r, ef: (i, 0)),
            scratch_shapes=[
                pltpu.VMEM((tn, H), jnp.float32),   # rel_emb of current relation
                pltpu.VMEM((tn, 1), jnp.float32),   # running max m
                pltpu.VMEM((tn, 1), jnp.float32),   # running denom l
                pltpu.VMEM((tn, H), jnp.float32),   # weighted accumulator
            ]),
        compiler_params=pltpu.CompilerParams(
            # dst-row tiles shard across TensorCores (v7x megacore); the
            # relation axis carries the online-softmax state -> "arbitrary".
            # (When scaling N, also raise vmem_limit_bytes and row_tile.)
            dimension_semantics=("parallel", "arbitrary")),
    )
    return kernel(edge_flags, adj_bf16, x, x, r_out, r_in,
                  params["w_gcn"], params["w_loop"], params["b_gcn"],
                  params["w_lt"], params["b_lt"],
                  params["w_q"], params["b_q"], wa_row)


# ----------------------------------------------------------------------------
# Pure-JAX reference (mirrors the PyTorch forward exactly)
# ----------------------------------------------------------------------------
def reference(adj, x, params):
    R = adj.shape[0]
    loop_msg = x @ params["w_lt"] + params["b_lt"]
    outs = []
    for r in range(R):
        A = adj[r]
        if float(jnp.sum(A)) == 0.0:
            outs.append(loop_msg)
            continue
        out_deg = jnp.maximum(A.sum(axis=0), 1.0)
        in_deg = jnp.maximum(A.sum(axis=1), 1.0)
        feat_src = x * lax.rsqrt(out_deg)[:, None]
        rst = (A @ feat_src) @ params["w_gcn"][r]
        rst = rst * lax.rsqrt(in_deg)[:, None]
        rst = rst + params["b_gcn"][r]
        rst = rst + x @ params["w_loop"][r]
        outs.append(rst)
    rel = jnp.stack(outs, axis=0)                                         # (R, N, H)
    s = jnp.tanh(rel @ params["w_q"] + params["b_q"]) @ params["w_a"]     # (R, N, 1)
    attn = jax.nn.softmax(s, axis=0)
    return jnp.sum(attn * rel, axis=0)


# ----------------------------------------------------------------------------
# Main
# ----------------------------------------------------------------------------
if __name__ == "__main__":
    # args: dim_hiddens=32, dim_query=16, rel_conv_type='GCN',
    #       rel_combine='query', residual=True, |edge_types|=3
    R, N, H, Dq = 3, 16, 32, 16

    key = jax.random.PRNGKey(0)
    keys = jax.random.split(key, 10)

    x = jax.random.normal(keys[0], (N, H), dtype=jnp.float32)

    # Dense adjacency per relation; relation 2 has zero edges (exercises the
    # loop_trans fallback path of HeteroGraphConv.obtain_rel_embs).
    adj = (jax.random.uniform(keys[1], (R, N, N)) < 0.3).astype(jnp.float32)
    adj = adj.at[2].set(0.0)

    def xavier(k, shape):
        fan_in, fan_out = shape[-2], shape[-1]
        limit = np.sqrt(6.0 / (fan_in + fan_out))
        return jax.random.uniform(k, shape, jnp.float32, -limit, limit)

    params = {
        # per-relation GraphConv: weight (in,out), bias zeros, loop_weight (in,out)
        "w_gcn": xavier(keys[2], (R, H, H)),
        "b_gcn": jnp.zeros((R, 1, H), jnp.float32),
        "w_loop": xavier(keys[3], (R, H, H)),
        # HeteroGraphConv.loop_trans
        "w_lt": xavier(keys[4], (H, H)),
        "b_lt": 0.01 * jax.random.normal(keys[5], (1, H), jnp.float32),
        # Attention('query'): Linear(H, Dq) -> Tanh -> Linear(Dq, 1, bias=False)
        "w_q": xavier(keys[6], (H, Dq)),
        "b_q": 0.01 * jax.random.normal(keys[7], (1, Dq), jnp.float32),
        "w_a": xavier(keys[8], (Dq, 1)),
    }

    out = hetero_graph_conv(adj, x, params)
    out = jax.block_until_ready(out)

    ref = reference(adj, x, params)
    np.testing.assert_allclose(np.asarray(out), np.asarray(ref),
                               rtol=1e-5, atol=1e-5)
    print("KERNEL_OK")
</pallas_src>

<mosaic_0001>
module attributes {stable_mosaic.version = 11 : i64} {
  func.func @_hetero_gcn_query_kernel(%arg0: i32, %arg1: i32, %arg2: memref<3xi32, #tpu.memory_space<smem>>, %arg3: memref<1x16x16xbf16, #tpu.memory_space<vmem>>, %arg4: memref<16x32xf32, #tpu.memory_space<vmem>>, %arg5: memref<16x32xf32, #tpu.memory_space<vmem>>, %arg6: memref<1x16x1xf32, #tpu.memory_space<vmem>>, %arg7: memref<1x16x1xf32, #tpu.memory_space<vmem>>, %arg8: memref<1x32x32xf32, #tpu.memory_space<vmem>>, %arg9: memref<1x32x32xf32, #tpu.memory_space<vmem>>, %arg10: memref<1x1x32xf32, #tpu.memory_space<vmem>>, %arg11: memref<32x32xf32, #tpu.memory_space<vmem>>, %arg12: memref<1x32xf32, #tpu.memory_space<vmem>>, %arg13: memref<32x16xf32, #tpu.memory_space<vmem>>, %arg14: memref<1x16xf32, #tpu.memory_space<vmem>>, %arg15: memref<1x16xf32, #tpu.memory_space<vmem>>, %arg16: memref<16x32xf32, #tpu.memory_space<vmem>>, %arg17: memref<16x32xf32, #tpu.memory_space<vmem>>, %arg18: memref<16x1xf32, #tpu.memory_space<vmem>>, %arg19: memref<16x1xf32, #tpu.memory_space<vmem>>, %arg20: memref<16x32xf32, #tpu.memory_space<vmem>>) attributes {dimension_semantics = [#tpu.dimension_semantics<parallel>, #tpu.dimension_semantics<arbitrary>], iteration_bounds = array<i64: 1, 3>, scalar_prefetch = 1 : i64, scratch_operands = 4 : i64, tpu.core_type = #tpu.core_type<tc>, window_params = [{transform_indices = @transform_0, window_bounds = array<i64: 1, 16, 16>}, {pipeline_mode = #tpu.pipeline_mode<synchronous>, transform_indices = @transform_1, window_bounds = array<i64: 16, 32>}, {transform_indices = @transform_2, window_bounds = array<i64: 16, 32>}, {transform_indices = @transform_3, window_bounds = array<i64: 1, 16, 1>}, {transform_indices = @transform_4, window_bounds = array<i64: 1, 16, 1>}, {transform_indices = @transform_5, window_bounds = array<i64: 1, 32, 32>}, {transform_indices = @transform_6, window_bounds = array<i64: 1, 32, 32>}, {transform_indices = @transform_7, window_bounds = array<i64: 1, 1, 32>}, {pipeline_mode = #tpu.pipeline_mode<synchronous>, transform_indices = @transform_8, window_bounds = array<i64: 32, 32>}, {pipeline_mode = #tpu.pipeline_mode<synchronous>, transform_indices = @transform_9, window_bounds = array<i64: 1, 32>}, {pipeline_mode = #tpu.pipeline_mode<synchronous>, transform_indices = @transform_10, window_bounds = array<i64: 32, 16>}, {pipeline_mode = #tpu.pipeline_mode<synchronous>, transform_indices = @transform_11, window_bounds = array<i64: 1, 16>}, {pipeline_mode = #tpu.pipeline_mode<synchronous>, transform_indices = @transform_12, window_bounds = array<i64: 1, 16>}, {transform_indices = @transform_13, window_bounds = array<i64: 16, 32>}]} {
    %c0_i32 = arith.constant 0 : i32
    %0 = arith.cmpi eq, %arg1, %c0_i32 : i32
    %1 = arith.extui %0 : i1 to i32
    %c0_i32_0 = arith.constant 0 : i32
    %2 = arith.cmpi ne, %1, %c0_i32_0 : i32
    scf.if %2 {
      %cst_25 = arith.constant 0xFF800000 : f32
      %44 = vector.broadcast %cst_25 : f32 to vector<16x1xf32>
      %c0_26 = arith.constant 0 : index
      %c0_27 = arith.constant 0 : index
      %45 = vector.load %arg18[%c0_26, %c0_27] : memref<16x1xf32, #tpu.memory_space<vmem>>, vector<16x1xf32>
      tpu.vector_store %arg18[%c0_26, %c0_27], %44 {strides = array<i32>} : memref<16x1xf32, #tpu.memory_space<vmem>>, vector<16x1xf32>,
      %cst_28 = arith.constant 0.000000e+00 : f32
      %46 = vector.broadcast %cst_28 : f32 to vector<16x1xf32>
      %c0_29 = arith.constant 0 : index
      %c0_30 = arith.constant 0 : index
      %47 = vector.load %arg19[%c0_29, %c0_30] : memref<16x1xf32, #tpu.memory_space<vmem>>, vector<16x1xf32>
      tpu.vector_store %arg19[%c0_29, %c0_30], %46 {strides = array<i32>} : memref<16x1xf32, #tpu.memory_space<vmem>>, vector<16x1xf32>,
      %cst_31 = arith.constant 0.000000e+00 : f32
      %48 = vector.broadcast %cst_31 : f32 to vector<16x32xf32>
      %c0_32 = arith.constant 0 : index
      %c0_33 = arith.constant 0 : index
      %49 = vector.load %arg20[%c0_32, %c0_33] : memref<16x32xf32, #tpu.memory_space<vmem>>, vector<16x32xf32>
      tpu.vector_store %arg20[%c0_32, %c0_33], %48 {strides = array<i32>} : memref<16x32xf32, #tpu.memory_space<vmem>>, vector<16x32xf32>,
    } else {
    }
    %3 = arith.index_cast %arg1 : i32 to index
    %4 = memref.load %arg2[%3] : memref<3xi32, #tpu.memory_space<smem>>
    %c0_i32_1 = arith.constant 0 : i32
    %5 = arith.cmpi sgt, %4, %c0_i32_1 : i32
    %6 = arith.extui %5 : i1 to i32
    %c0_i32_2 = arith.constant 0 : i32
    %7 = arith.cmpi ne, %6, %c0_i32_2 : i32
    scf.if %7 {
      %c0_25 = arith.constant 0 : index
      %c0_26 = arith.constant 0 : index
      %c0_27 = arith.constant 0 : index
      %44 = vector.load %arg3[%c0_25, %c0_26, %c0_27] : memref<1x16x16xbf16, #tpu.memory_space<vmem>>, vector<1x16x16xbf16>
      %45 = vector.shape_cast %44 : vector<1x16x16xbf16> to vector<16x16xbf16>
      %46 = arith.extf %45 : vector<16x16xbf16> to vector<16x16xf32>
      %c0_28 = arith.constant 0 : index
      %c0_29 = arith.constant 0 : index
      %47 = vector.load %arg4[%c0_28, %c0_29] : memref<16x32xf32, #tpu.memory_space<vmem>>, vector<16x32xf32>
      %c0_30 = arith.constant 0 : index
      %c0_31 = arith.constant 0 : index
      %c0_32 = arith.constant 0 : index
      %48 = vector.load %arg6[%c0_30, %c0_31, %c0_32] : memref<1x16x1xf32, #tpu.memory_space<vmem>>, vector<1x16x1xf32>
      %49 = vector.shape_cast %48 : vector<1x16x1xf32> to vector<16x1xf32>
      %50 = vector.broadcast %49 : vector<16x1xf32> to vector<16x32xf32>
      %51 = arith.mulf %47, %50 : vector<16x32xf32>
      %cst_33 = arith.constant dense<0.000000e+00> : vector<16x32xf32>
      %52 = tpu.matmul %46, %51, %cst_33 {dimension_numbers = #tpu.dot_dimension_numbers<[1], [0], [0], [1], [0, 0, 1, 1], [], []>} : vector<16x16xf32>, vector<16x32xf32>, vector<16x32xf32> -> vector<16x32xf32>
      %c0_34 = arith.constant 0 : index
      %c0_35 = arith.constant 0 : index
      %c0_36 = arith.constant 0 : index
      %53 = vector.load %arg7[%c0_34, %c0_35, %c0_36] : memref<1x16x1xf32, #tpu.memory_space<vmem>>, vector<1x16x1xf32>
      %54 = vector.shape_cast %53 : vector<1x16x1xf32> to vector<16x1xf32>
      %55 = vector.broadcast %54 : vector<16x1xf32> to vector<16x32xf32>
      %56 = arith.mulf %52, %55 : vector<16x32xf32>
      %c0_37 = arith.constant 0 : index
      %c0_38 = arith.constant 0 : index
      %c0_39 = arith.constant 0 : index
      %57 = vector.load %arg8[%c0_37, %c0_38, %c0_39] : memref<1x32x32xf32, #tpu.memory_space<vmem>>, vector<1x32x32xf32>
      %58 = vector.shape_cast %57 : vector<1x32x32xf32> to vector<32x32xf32>
      %cst_40 = arith.constant dense<0.000000e+00> : vector<16x32xf32>
      %59 = tpu.matmul %56, %58, %cst_40 {dimension_numbers = #tpu.dot_dimension_numbers<[1], [0], [0], [1], [0, 0, 1, 1], [], []>} : vector<16x32xf32>, vector<32x32xf32>, vector<16x32xf32> -> vector<16x32xf32>
      %c0_41 = arith.constant 0 : index
      %c0_42 = arith.constant 0 : index
      %60 = vector.load %arg5[%c0_41, %c0_42] : memref<16x32xf32, #tpu.memory_space<vmem>>, vector<16x32xf32>
      %c0_43 = arith.constant 0 : index
      %c0_44 = arith.constant 0 : index
      %c0_45 = arith.constant 0 : index
      %61 = vector.load %arg9[%c0_43, %c0_44, %c0_45] : memref<1x32x32xf32, #tpu.memory_space<vmem>>, vector<1x32x32xf32>
      %62 = vector.shape_cast %61 : vector<1x32x32xf32> to vector<32x32xf32>
      %cst_46 = arith.constant dense<0.000000e+00> : vector<16x32xf32>
      %63 = tpu.matmul %60, %62, %cst_46 {dimension_numbers = #tpu.dot_dimension_numbers<[1], [0], [0], [1], [0, 0, 1, 1], [], []>} : vector<16x32xf32>, vector<32x32xf32>, vector<16x32xf32> -> vector<16x32xf32>
      %64 = arith.addf %59, %63 : vector<16x32xf32>
      %c0_47 = arith.constant 0 : index
      %c0_48 = arith.constant 0 : index
      %c0_49 = arith.constant 0 : index
      %65 = vector.load %arg10[%c0_47, %c0_48, %c0_49] : memref<1x1x32xf32, #tpu.memory_space<vmem>>, vector<1x1x32xf32>
      %66 = vector.shape_cast %65 : vector<1x1x32xf32> to vector<1x32xf32>
      %67 = vector.broadcast %66 : vector<1x32xf32> to vector<16x32xf32>
      %68 = arith.addf %64, %67 : vector<16x32xf32>
      %c0_50 = arith.constant 0 : index
      %c0_51 = arith.constant 0 : index
      %69 = vector.load %arg17[%c0_50, %c0_51] : memref<16x32xf32, #tpu.memory_space<vmem>>, vector<16x32xf32>
      tpu.vector_store %arg17[%c0_50, %c0_51], %68 {strides = array<i32>} : memref<16x32xf32, #tpu.memory_space<vmem>>, vector<16x32xf32>,
    } else {
    }
    %true = arith.constant true
    %8 = arith.xori %5, %true : i1
    %9 = arith.extui %8 : i1 to i32
    %c0_i32_3 = arith.constant 0 : i32
    %10 = arith.cmpi ne, %9, %c0_i32_3 : i32
    scf.if %10 {
      %c0_25 = arith.constant 0 : index
      %c0_26 = arith.constant 0 : index
      %44 = vector.load %arg5[%c0_25, %c0_26] : memref<16x32xf32, #tpu.memory_space<vmem>>, vector<16x32xf32>
      %c0_27 = arith.constant 0 : index
      %c0_28 = arith.constant 0 : index
      %45 = vector.load %arg11[%c0_27, %c0_28] : memref<32x32xf32, #tpu.memory_space<vmem>>, vector<32x32xf32>
      %cst_29 = arith.constant dense<0.000000e+00> : vector<16x32xf32>
      %46 = tpu.matmul %44, %45, %cst_29 {dimension_numbers = #tpu.dot_dimension_numbers<[1], [0], [0], [1], [0, 0, 1, 1], [], []>} : vector<16x32xf32>, vector<32x32xf32>, vector<16x32xf32> -> vector<16x32xf32>
      %c0_30 = arith.constant 0 : index
      %c0_31 = arith.constant 0 : index
      %47 = vector.load %arg12[%c0_30, %c0_31] : memref<1x32xf32, #tpu.memory_space<vmem>>, vector<1x32xf32>
      %48 = vector.broadcast %47 : vector<1x32xf32> to vector<16x32xf32>
      %49 = arith.addf %46, %48 : vector<16x32xf32>
      %c0_32 = arith.constant 0 : index
      %c0_33 = arith.constant 0 : index
      %50 = vector.load %arg17[%c0_32, %c0_33] : memref<16x32xf32, #tpu.memory_space<vmem>>, vector<16x32xf32>
      tpu.vector_store %arg17[%c0_32, %c0_33], %49 {strides = array<i32>} : memref<16x32xf32, #tpu.memory_space<vmem>>, vector<16x32xf32>,
    } else {
    }
    %c0 = arith.constant 0 : index
    %c0_4 = arith.constant 0 : index
    %11 = vector.load %arg17[%c0, %c0_4] : memref<16x32xf32, #tpu.memory_space<vmem>>, vector<16x32xf32>
    %c0_5 = arith.constant 0 : index
    %c0_6 = arith.constant 0 : index
    %12 = vector.load %arg13[%c0_5, %c0_6] : memref<32x16xf32, #tpu.memory_space<vmem>>, vector<32x16xf32>
    %cst = arith.constant dense<0.000000e+00> : vector<16x16xf32>
    %13 = tpu.matmul %11, %12, %cst {dimension_numbers = #tpu.dot_dimension_numbers<[1], [0], [0], [1], [0, 0, 1, 1], [], []>} : vector<16x32xf32>, vector<32x16xf32>, vector<16x16xf32> -> vector<16x16xf32>
    %c0_7 = arith.constant 0 : index
    %c0_8 = arith.constant 0 : index
    %14 = vector.load %arg14[%c0_7, %c0_8] : memref<1x16xf32, #tpu.memory_space<vmem>>, vector<1x16xf32>
    %15 = vector.broadcast %14 : vector<1x16xf32> to vector<16x16xf32>
    %16 = arith.addf %13, %15 : vector<16x16xf32>
    %17 = math.tanh %16 : vector<16x16xf32>
    %c0_9 = arith.constant 0 : index
    %c0_10 = arith.constant 0 : index
    %18 = vector.load %arg15[%c0_9, %c0_10] : memref<1x16xf32, #tpu.memory_space<vmem>>, vector<1x16xf32>
    %19 = vector.broadcast %18 : vector<1x16xf32> to vector<16x16xf32>
    %20 = arith.mulf %17, %19 : vector<16x16xf32>
    %cst_11 = arith.constant dense<0.000000e+00> : vector<16xf32>
    %21 = vector.multi_reduction <add>, %20, %cst_11 [1] : vector<16x16xf32> to vector<16xf32>
    %22 = vector.shape_cast %21 : vector<16xf32> to vector<16x1xf32>
    %c0_12 = arith.constant 0 : index
    %c0_13 = arith.constant 0 : index
    %23 = vector.load %arg18[%c0_12, %c0_13] : memref<16x1xf32, #tpu.memory_space<vmem>>, vector<16x1xf32>
    %24 = arith.maximumf %23, %22 : vector<16x1xf32>
    %25 = arith.subf %23, %24 : vector<16x1xf32>
    %26 = math.exp %25 : vector<16x1xf32>
    %27 = arith.subf %22, %24 : vector<16x1xf32>
    %28 = math.exp %27 : vector<16x1xf32>
    %c0_14 = arith.constant 0 : index
    %c0_15 = arith.constant 0 : index
    %29 = vector.load %arg19[%c0_14, %c0_15] : memref<16x1xf32, #tpu.memory_space<vmem>>, vector<16x1xf32>
    %30 = arith.mulf %26, %29 : vector<16x1xf32>
    %31 = arith.addf %30, %28 : vector<16x1xf32>
    %c0_16 = arith.constant 0 : index
    %c0_17 = arith.constant 0 : index
    %32 = vector.load %arg19[%c0_16, %c0_17] : memref<16x1xf32, #tpu.memory_space<vmem>>, vector<16x1xf32>
    tpu.vector_store %arg19[%c0_16, %c0_17], %31 {strides = array<i32>} : memref<16x1xf32, #tpu.memory_space<vmem>>, vector<16x1xf32>,
    %c0_18 = arith.constant 0 : index
    %c0_19 = arith.constant 0 : index
    %33 = vector.load %arg20[%c0_18, %c0_19] : memref<16x32xf32, #tpu.memory_space<vmem>>, vector<16x32xf32>
    %34 = vector.broadcast %26 : vector<16x1xf32> to vector<16x32xf32>
    %35 = arith.mulf %34, %33 : vector<16x32xf32>
    %36 = vector.broadcast %28 : vector<16x1xf32> to vector<16x32xf32>
    %37 = arith.mulf %36, %11 : vector<16x32xf32>
    %38 = arith.addf %35, %37 : vector<16x32xf32>
    %c0_20 = arith.constant 0 : index
    %c0_21 = arith.constant 0 : index
    %39 = vector.load %arg20[%c0_20, %c0_21] : memref<16x32xf32, #tpu.memory_space<vmem>>, vector<16x32xf32>
    tpu.vector_store %arg20[%c0_20, %c0_21], %38 {strides = array<i32>} : memref<16x32xf32, #tpu.memory_space<vmem>>, vector<16x32xf32>,
    %c0_22 = arith.constant 0 : index
    %c0_23 = arith.constant 0 : index
    %40 = vector.load %arg18[%c0_22, %c0_23] : memref<16x1xf32, #tpu.memory_space<vmem>>, vector<16x1xf32>
    tpu.vector_store %arg18[%c0_22, %c0_23], %24 {strides = array<i32>} : memref<16x1xf32, #tpu.memory_space<vmem>>, vector<16x1xf32>,
    %c2_i32 = arith.constant 2 : i32
    %41 = arith.cmpi eq, %arg1, %c2_i32 : i32
    %42 = arith.extui %41 : i1 to i32
    %c0_i32_24 = arith.constant 0 : i32
    %43 = arith.cmpi ne, %42, %c0_i32_24 : i32
    scf.if %43 {
      %c0_25 = arith.constant 0 : index
      %c0_26 = arith.constant 0 : index
      %44 = vector.load %arg20[%c0_25, %c0_26] : memref<16x32xf32, #tpu.memory_space<vmem>>, vector<16x32xf32>
      %c0_27 = arith.constant 0 : index
      %c0_28 = arith.constant 0 : index
      %45 = vector.load %arg19[%c0_27, %c0_28] : memref<16x1xf32, #tpu.memory_space<vmem>>, vector<16x1xf32>
      %46 = vector.broadcast %45 : vector<16x1xf32> to vector<16x32xf32>
      %47 = arith.divf %44, %46 : vector<16x32xf32>
      %c0_29 = arith.constant 0 : index
      %c0_30 = arith.constant 0 : index
      %48 = vector.load %arg16[%c0_29, %c0_30] : memref<16x32xf32, #tpu.memory_space<vmem>>, vector<16x32xf32>
      tpu.vector_store %arg16[%c0_29, %c0_30], %47 {strides = array<i32>} : memref<16x32xf32, #tpu.memory_space<vmem>>, vector<16x32xf32>,
    } else {
    }
    return
  }
  func.func @transform_0(%arg0: i32, %arg1: i32, %arg2: memref<3xi32, #tpu.memory_space<smem>>) -> (i32, i32, i32) {
    %c0_i32 = arith.constant 0 : i32
    %c0_i32_0 = arith.constant 0 : i32
    return %arg1, %arg0, %c0_i32 : i32, i32, i32
  }
  func.func @transform_1(%arg0: i32, %arg1: i32, %arg2: memref<3xi32, #tpu.memory_space<smem>>) -> (i32, i32) {
    %c0_i32 = arith.constant 0 : i32
    %c0_i32_0 = arith.constant 0 : i32
    %c0_i32_1 = arith.constant 0 : i32
    return %c0_i32, %c0_i32_0 : i32, i32
  }
  func.func @transform_2(%arg0: i32, %arg1: i32, %arg2: memref<3xi32, #tpu.memory_space<smem>>) -> (i32, i32) {
    %c0_i32 = arith.constant 0 : i32
    %c0_i32_0 = arith.constant 0 : i32
    return %arg0, %c0_i32 : i32, i32
  }
  func.func @transform_3(%arg0: i32, %arg1: i32, %arg2: memref<3xi32, #tpu.memory_space<smem>>) -> (i32, i32, i32) {
    %c0_i32 = arith.constant 0 : i32
    %c0_i32_0 = arith.constant 0 : i32
    %c0_i32_1 = arith.constant 0 : i32
    return %arg1, %c0_i32, %c0_i32_0 : i32, i32, i32
  }
  func.func @transform_4(%arg0: i32, %arg1: i32, %arg2: memref<3xi32, #tpu.memory_space<smem>>) -> (i32, i32, i32) {
    %c0_i32 = arith.constant 0 : i32
    %c0_i32_0 = arith.constant 0 : i32
    return %arg1, %arg0, %c0_i32 : i32, i32, i32
  }
  func.func @transform_5(%arg0: i32, %arg1: i32, %arg2: memref<3xi32, #tpu.memory_space<smem>>) -> (i32, i32, i32) {
    %c0_i32 = arith.constant 0 : i32
    %c0_i32_0 = arith.constant 0 : i32
    %c0_i32_1 = arith.constant 0 : i32
    return %arg1, %c0_i32, %c0_i32_0 : i32, i32, i32
  }
  func.func @transform_6(%arg0: i32, %arg1: i32, %arg2: memref<3xi32, #tpu.memory_space<smem>>) -> (i32, i32, i32) {
    %c0_i32 = arith.constant 0 : i32
    %c0_i32_0 = arith.constant 0 : i32
    %c0_i32_1 = arith.constant 0 : i32
    return %arg1, %c0_i32, %c0_i32_0 : i32, i32, i32
  }
  func.func @transform_7(%arg0: i32, %arg1: i32, %arg2: memref<3xi32, #tpu.memory_space<smem>>) -> (i32, i32, i32) {
    %c0_i32 = arith.constant 0 : i32
    %c0_i32_0 = arith.constant 0 : i32
    %c0_i32_1 = arith.constant 0 : i32
    return %arg1, %c0_i32, %c0_i32_0 : i32, i32, i32
  }
  func.func @transform_8(%arg0: i32, %arg1: i32, %arg2: memref<3xi32, #tpu.memory_space<smem>>) -> (i32, i32) {
    %c0_i32 = arith.constant 0 : i32
    %c0_i32_0 = arith.constant 0 : i32
    %c0_i32_1 = arith.constant 0 : i32
    return %c0_i32, %c0_i32_0 : i32, i32
  }
  func.func @transform_9(%arg0: i32, %arg1: i32, %arg2: memref<3xi32, #tpu.memory_space<smem>>) -> (i32, i32) {
    %c0_i32 = arith.constant 0 : i32
    %c0_i32_0 = arith.constant 0 : i32
    %c0_i32_1 = arith.constant 0 : i32
    return %c0_i32, %c0_i32_0 : i32, i32
  }
  func.func @transform_10(%arg0: i32, %arg1: i32, %arg2: memref<3xi32, #tpu.memory_space<smem>>) -> (i32, i32) {
    %c0_i32 = arith.constant 0 : i32
    %c0_i32_0 = arith.constant 0 : i32
    %c0_i32_1 = arith.constant 0 : i32
    return %c0_i32, %c0_i32_0 : i32, i32
  }
  func.func @transform_11(%arg0: i32, %arg1: i32, %arg2: memref<3xi32, #tpu.memory_space<smem>>) -> (i32, i32) {
    %c0_i32 = arith.constant 0 : i32
    %c0_i32_0 = arith.constant 0 : i32
    %c0_i32_1 = arith.constant 0 : i32
    return %c0_i32, %c0_i32_0 : i32, i32
  }
  func.func @transform_12(%arg0: i32, %arg1: i32, %arg2: memref<3xi32, #tpu.memory_space<smem>>) -> (i32, i32) {
    %c0_i32 = arith.constant 0 : i32
    %c0_i32_0 = arith.constant 0 : i32
    %c0_i32_1 = arith.constant 0 : i32
    return %c0_i32, %c0_i32_0 : i32, i32
  }
  func.func @transform_13(%arg0: i32, %arg1: i32, %arg2: memref<3xi32, #tpu.memory_space<smem>>) -> (i32, i32) {
    %c0_i32 = arith.constant 0 : i32
    %c0_i32_0 = arith.constant 0 : i32
    return %arg0, %c0_i32 : i32, i32
  }
}

</mosaic_0001>

<llo_original>
// kernel: tpu_custom_call.1
$region0: #{tpu_custom_call.1}
  #allocation0 [shape = 'u32[]', space=smem, size = 0x4, offset = 0x4, fixed_abs, tag = 'smem constant byte address 0x4 - core index']
  #allocation1 [shape = 'u32[72,128]{1,0:T(1,128)}', space=vmem, size = 0x9000, scoped, tag = 'internal scratch']
  #allocation2 [shape = 'f32[16,32]{1,0:T(8,128)}', space=vmem, size = 0x2000, scoped, tag = 'scratch operand']
  #allocation3 [shape = 'f32[16,1]{1,0:T(8,128)}', space=vmem, size = 0x2000, scoped, tag = 'scratch operand']
  #allocation4 [shape = 'f32[16,1]{1,0:T(8,128)}', space=vmem, size = 0x2000, scoped, tag = 'scratch operand']
  #allocation5 [shape = 'f32[16,32]{1,0:T(8,128)}', space=vmem, size = 0x2000, scoped, tag = 'scratch operand']
  #allocation6 [shape = 's32[1]{0}', space=sflag, size = 0x4, scoped, tag = 'scoped memory for tpu_custom_call.1']
  #allocation7 [shape = 'u8[512]{0}', space=smem, size = 0x200, scoped, tag = 'prefetched SMEM operand 0']
  %s0 = inlined_call_operand.hbm [shape: s32[3], index: 0, kind: input, shape index: {}]
  %s1 = inlined_call_operand.hbm [shape: bf16[3,16,16], index: 1, kind: input, shape index: {}]
  %s2 = inlined_call_operand.vmem [shape: f32[16,32], index: 2, kind: input, shape index: {}]
  %s3 = inlined_call_operand.hbm [shape: f32[16,32], index: 3, kind: input, shape index: {}]
  %s4 = inlined_call_operand.vmem [shape: f32[3,16,1], index: 4, kind: input, shape index: {}]
  %s5 = inlined_call_operand.vmem [shape: f32[3,16,1], index: 5, kind: input, shape index: {}]
  %s6 = inlined_call_operand.vmem [shape: f32[3,32,32], index: 6, kind: input, shape index: {}]
  %s7 = inlined_call_operand.hbm [shape: f32[3,32,32], index: 7, kind: input, shape index: {}]
  %s8 = inlined_call_operand.vmem [shape: f32[3,1,32], index: 8, kind: input, shape index: {}]
  %s9 = inlined_call_operand.vmem [shape: f32[32,32], index: 9, kind: input, shape index: {}]
  %s10 = inlined_call_operand.vmem [shape: f32[1,32], index: 10, kind: input, shape index: {}]
  %s11 = inlined_call_operand.vmem [shape: f32[32,16], index: 11, kind: input, shape index: {}]
  %s12 = inlined_call_operand.vmem [shape: f32[1,16], index: 12, kind: input, shape index: {}]
  %s13 = inlined_call_operand.vmem [shape: f32[1,16], index: 13, kind: input, shape index: {}]
  %s14 = inlined_call_operand.hbm [shape: f32[16,32], index: 14, kind: output, shape index: {}]
  %s15 = sld [smem:[#allocation0]]
  $region113: #{tpu_custom_call.1} parent=0
    _
  %s17 = ssub.s32 1, %s15
  %s18 = scalar_select 0, %s17, %s15
  %s20 = sshll.u32 %s0, 4
  %s21 = int_to_ptr.hbm [resolvable:$true] %s20
  %23 = dma.hbm_to_smem %s21, 16, [#allocation7], [#allocation6]
  %25 = dma.done [#allocation6], 16
  %26 = sfence
  $region1: #{tpu_custom_call.1} parent=0
    #allocation8 [shape = 'u8[8192]{0}', space=vmem, size = 0x2000, scoped, tag = 'input window, operand 1']
    #allocation9 [shape = 's32[2]{0}', space=sflag, size = 0x8, scoped, tag = 'scoped memory for tpu_custom_call.1']
    #allocation10 [shape = 's32[2]{0}', space=sflag, size = 0x8, scoped, tag = 'scoped memory for tpu_custom_call.1']
    #allocation11 [shape = 'u8[8192]{0}', space=vmem, size = 0x2000, scoped, tag = 'input window, operand 3, single buffered']
    #allocation12 [shape = 's32[1]{0}', space=sflag, size = 0x4, scoped, tag = 'scoped memory for tpu_custom_call.1']
    #allocation13 [shape = 'u8[32768]{0}', space=vmem, size = 0x8000, scoped, tag = 'input window, operand 7']
    #allocation14 [shape = 'u8[8192]{0}', space=vmem, size = 0x2000, scoped, tag = 'output window, operand 0, single buffered']
    %27 = vsyncpa [#allocation9], 0
    %s28 = scalar_lea.sflag [#allocation9], 1
    %29 = vsyncpa %s28, 0
    %30 = vsyncpa [#allocation12], 0
    %31 = vsyncpa [#allocation10], 0
    loop: start=0, step=1, limit=5
    $region2: #{tpu_custom_call.1} parent=1 // loop_pre_header
      _
    $region3: #{tpu_custom_call.1} parent=1 // loop_header
      %s33 = sphi 0, %s37
      %p34 = scmp.ge.s32.totalorder %s33, 5
      %s40 = sphi 0, %s52
      %s41 = sphi 0, %s48
      %s42 = sphi 0, %s40
      %s43 = sphi 0, %s41
      %s44 = sphi 0, %s42
      %s45 = sphi 0, %s43
      %s57 = sphi 0, %s59
      %s60 = sphi 0, %s57
      %s61 = sphi 0, %s60
      %s77 = sphi 0, %s61
      %s81 = sphi 0, %s81
      %s83 = sphi 0, %s81
      %s84 = sphi 0, %s83
      %s98 = sphi 0, %s84
      %s104 = sphi 0, %s106
      %s107 = sphi 0, %s104
      %s108 = sphi 0, %s107
      %s124 = sphi 0, %s108
      %s130 = sphi 0, %s132
      %s133 = sphi 0, %s130
      %s134 = sphi 0, %s133
      %s150 = sphi 0, %s134
      %s158 = sphi 0, %s160
      %s161 = sphi 0, %s158
      %s162 = sphi 0, %s161
      %s178 = sphi 0, %s162
      %s184 = sphi 0, %s186
      %s187 = sphi 0, %s184
      %s188 = sphi 0, %s187
      %s204 = sphi 0, %s188
      %s210 = sphi 0, %s212
      %s213 = sphi 0, %s210
      %s214 = sphi 0, %s213
      %s230 = sphi 0, %s214
      %s236 = sphi 0, %s238
      %s239 = sphi 0, %s236
      %s240 = sphi 0, %s239
      %s256 = sphi 0, %s240
      %s260 = sphi 0, %s260
      %s262 = sphi 0, %s260
      %s263 = sphi 0, %s262
      %s277 = sphi 0, %s263
      %s281 = sphi 0, %s281
      %s283 = sphi 0, %s281
      %s284 = sphi 0, %s283
      %s298 = sphi 0, %s284
      %s302 = sphi 0, %s302
      %s304 = sphi 0, %s302
      %s305 = sphi 0, %s304
      %s319 = sphi 0, %s305
      %s323 = sphi 0, %s323
      %s325 = sphi 0, %s323
      %s326 = sphi 0, %s325
      %s340 = sphi 0, %s326
      %s344 = sphi 0, %s344
      %s346 = sphi 0, %s344
      %s347 = sphi 0, %s346
      %s361 = sphi 0, %s347
      %s367 = sphi 0, %s369
      %s370 = sphi 0, %s367
      %s371 = sphi 0, %s370
      %s387 = sphi 0, %s371
    $region4: #{tpu_custom_call.1} parent=1 // loop_header_branch
      %36 = sbr.rel (%p34) target = $region8
    $region5: #{tpu_custom_call.1} parent=1 // loop_body
      %s38 = ssub.s32 %s33, 1
      %s39 = ssub.s32 %s33, 2
      %s46 = sadd.s32 1, %s41
      %p47 = scmp.ge.s32.totalorder %s46, 3
      %s48 = scalar_select %p47, 0, %s46
      %s49 = sadd.s32 1, %s40
      %s50 = scalar_select %p47, %s49, %s40
      %p51 = scmp.ge.s32.totalorder %s50, 1
      %s52 = scalar_select %p51, 0, %s50
      %s53 = ssub.s32 %s41, %s48
      %s54 = ssub.s32 %s40, %s52
      %s55 = sor.u32 %s53, %s54
      %p56 = scmp.eq.s32.totalorder %s55, 0
      %s58 = sadd.s32 %s57, 1
      %s59 = scalar_select %p56, %s57, %s58
      %p62 = pneg %p56
      %p63 = scmp.eq.s32.totalorder %s33, 2
      %p64 = por %p62, %p63
      %p65 = scmp.ne.s32.totalorder %s57, %s60
      %p66 = scmp.eq.s32.totalorder %s33, 0
      %p67 = por %p65, %p66
      %p68 = scmp.ne.s32.totalorder %s57, %s60
      %p69 = scmp.eq.s32.totalorder %s38, 2
      %p70 = por %p68, %p69
      %p71 = scmp.ne.s32.totalorder %s60, %s61
      %p72 = scmp.eq.s32.totalorder %s38, 0
      %p73 = por %p71, %p72
      %p74 = scmp.ne.s32.totalorder %s60, %s61
      %p75 = scmp.eq.s32.totalorder %s39, 2
      %p76 = por %p74, %p75
      %p78 = scmp.ne.s32.totalorder %s61, %s77
      %p79 = scmp.eq.s32.totalorder %s39, 0
      %p80 = por %p78, %p79
      %s82 = sadd.s32 %s81, 1
      %p85 = scmp.eq.s32.totalorder %s33, 2
      %p86 = scmp.ne.s32.totalorder %s81, %s83
      %p87 = scmp.eq.s32.totalorder %s33, 0
      %p88 = por %p86, %p87
      %p89 = scmp.ne.s32.totalorder %s81, %s83
      %p90 = scmp.eq.s32.totalorder %s38, 2
      %p91 = por %p89, %p90
      %p92 = scmp.ne.s32.totalorder %s83, %s84
      %p93 = scmp.eq.s32.totalorder %s38, 0
      %p94 = por %p92, %p93
      %p95 = scmp.ne.s32.totalorder %s83, %s84
      %p96 = scmp.eq.s32.totalorder %s39, 2
      %p97 = por %p95, %p96
      %p99 = scmp.ne.s32.totalorder %s84, %s98
      %p100 = scmp.eq.s32.totalorder %s39, 0
      %p101 = por %p99, %p100
      %s102 = ssub.s32 %s40, %s52
      %p103 = scmp.eq.s32.totalorder %s102, 0
      %s105 = sadd.s32 %s104, 1
      %s106 = scalar_select %p103, %s104, %s105
      %p109 = pneg %p103
      %p110 = scmp.eq.s32.totalorder %s33, 2
      %p111 = por %p109, %p110
      %p112 = scmp.ne.s32.totalorder %s104, %s107
      %p113 = scmp.eq.s32.totalorder %s33, 0
      %p114 = por %p112, %p113
      %p115 = scmp.ne.s32.totalorder %s104, %s107
      %p116 = scmp.eq.s32.totalorder %s38, 2
      %p117 = por %p115, %p116
      %p118 = scmp.ne.s32.totalorder %s107, %s108
      %p119 = scmp.eq.s32.totalorder %s38, 0
      %p120 = por %p118, %p119
      %p121 = scmp.ne.s32.totalorder %s107, %s108
      %p122 = scmp.eq.s32.totalorder %s39, 2
      %p123 = por %p121, %p122
      %p125 = scmp.ne.s32.totalorder %s108, %s124
      %p126 = scmp.eq.s32.totalorder %s39, 0
      %p127 = por %p125, %p126
      %s128 = ssub.s32 %s41, %s48
      %p129 = scmp.eq.s32.totalorder %s128, 0
      %s131 = sadd.s32 %s130, 1
      %s132 = scalar_select %p129, %s130, %s131
      %p135 = pneg %p129
      %p136 = scmp.eq.s32.totalorder %s33, 2
      %p137 = por %p135, %p136
      %p138 = scmp.ne.s32.totalorder %s130, %s133
      %p139 = scmp.eq.s32.totalorder %s33, 0
      %p140 = por %p138, %p139
      %p141 = scmp.ne.s32.totalorder %s130, %s133
      %p142 = scmp.eq.s32.totalorder %s38, 2
      %p143 = por %p141, %p142
      %p144 = scmp.ne.s32.totalorder %s133, %s134
      %p145 = scmp.eq.s32.totalorder %s38, 0
      %p146 = por %p144, %p145
      %p147 = scmp.ne.s32.totalorder %s133, %s134
      %p148 = scmp.eq.s32.totalorder %s39, 2
      %p149 = por %p147, %p148
      %p151 = scmp.ne.s32.totalorder %s134, %s150
      %p152 = scmp.eq.s32.totalorder %s39, 0
      %p153 = por %p151, %p152
      %s154 = ssub.s32 %s41, %s48
      %s155 = ssub.s32 %s40, %s52
      %s156 = sor.u32 %s154, %s155
      %p157 = scmp.eq.s32.totalorder %s156, 0
      %s159 = sadd.s32 %s158, 1
      %s160 = scalar_select %p157, %s158, %s159
      %p163 = pneg %p157
      %p164 = scmp.eq.s32.totalorder %s33, 2
      %p165 = por %p163, %p164
      %p166 = scmp.ne.s32.totalorder %s158, %s161
      %p167 = scmp.eq.s32.totalorder %s33, 0
      %p168 = por %p166, %p167
      %p169 = scmp.ne.s32.totalorder %s158, %s161
      %p170 = scmp.eq.s32.totalorder %s38, 2
      %p171 = por %p169, %p170
      %p172 = scmp.ne.s32.totalorder %s161, %s162
      %p173 = scmp.eq.s32.totalorder %s38, 0
      %p174 = por %p172, %p173
      %p175 = scmp.ne.s32.totalorder %s161, %s162
      %p176 = scmp.eq.s32.totalorder %s39, 2
      %p177 = por %p175, %p176
      %p179 = scmp.ne.s32.totalorder %s162, %s178
      %p180 = scmp.eq.s32.totalorder %s39, 0
      %p181 = por %p179, %p180
      %s182 = ssub.s32 %s41, %s48
      %p183 = scmp.eq.s32.totalorder %s182, 0
      %s185 = sadd.s32 %s184, 1
      %s186 = scalar_select %p183, %s184, %s185
      %p189 = pneg %p183
      %p190 = scmp.eq.s32.totalorder %s33, 2
      %p191 = por %p189, %p190
      %p192 = scmp.ne.s32.totalorder %s184, %s187
      %p193 = scmp.eq.s32.totalorder %s33, 0
      %p194 = por %p192, %p193
      %p195 = scmp.ne.s32.totalorder %s184, %s187
      %p196 = scmp.eq.s32.totalorder %s38, 2
      %p197 = por %p195, %p196
      %p198 = scmp.ne.s32.totalorder %s187, %s188
      %p199 = scmp.eq.s32.totalorder %s38, 0
      %p200 = por %p198, %p199
      %p201 = scmp.ne.s32.totalorder %s187, %s188
      %p202 = scmp.eq.s32.totalorder %s39, 2
      %p203 = por %p201, %p202
      %p205 = scmp.ne.s32.totalorder %s188, %s204
      %p206 = scmp.eq.s32.totalorder %s39, 0
      %p207 = por %p205, %p206
      %s208 = ssub.s32 %s41, %s48
      %p209 = scmp.eq.s32.totalorder %s208, 0
      %s211 = sadd.s32 %s210, 1
      %s212 = scalar_select %p209, %s210, %s211
      %p215 = pneg %p209
      %p216 = scmp.eq.s32.totalorder %s33, 2
      %p217 = por %p215, %p216
      %p218 = scmp.ne.s32.totalorder %s210, %s213
      %p219 = scmp.eq.s32.totalorder %s33, 0
      %p220 = por %p218, %p219
      %p221 = scmp.ne.s32.totalorder %s210, %s213
      %p222 = scmp.eq.s32.totalorder %s38, 2
      %p223 = por %p221, %p222
      %p224 = scmp.ne.s32.totalorder %s213, %s214
      %p225 = scmp.eq.s32.totalorder %s38, 0
      %p226 = por %p224, %p225
      %p227 = scmp.ne.s32.totalorder %s213, %s214
      %p228 = scmp.eq.s32.totalorder %s39, 2
      %p229 = por %p227, %p228
      %p231 = scmp.ne.s32.totalorder %s214, %s230
      %p232 = scmp.eq.s32.totalorder %s39, 0
      %p233 = por %p231, %p232
      %s234 = ssub.s32 %s41, %s48
      %p235 = scmp.eq.s32.totalorder %s234, 0
      %s237 = sadd.s32 %s236, 1
      %s238 = scalar_select %p235, %s236, %s237
      %p241 = pneg %p235
      %p242 = scmp.eq.s32.totalorder %s33, 2
      %p243 = por %p241, %p242
      %p244 = scmp.ne.s32.totalorder %s236, %s239
      %p245 = scmp.eq.s32.totalorder %s33, 0
      %p246 = por %p244, %p245
      %p247 = scmp.ne.s32.totalorder %s236, %s239
      %p248 = scmp.eq.s32.totalorder %s38, 2
      %p249 = por %p247, %p248
      %p250 = scmp.ne.s32.totalorder %s239, %s240
      %p251 = scmp.eq.s32.totalorder %s38, 0
      %p252 = por %p250, %p251
      %p253 = scmp.ne.s32.totalorder %s239, %s240
      %p254 = scmp.eq.s32.totalorder %s39, 2
      %p255 = por %p253, %p254
      %p257 = scmp.ne.s32.totalorder %s240, %s256
      %p258 = scmp.eq.s32.totalorder %s39, 0
      %p259 = por %p257, %p258
      %s261 = sadd.s32 %s260, 1
      %p264 = scmp.eq.s32.totalorder %s33, 2
      %p265 = scmp.ne.s32.totalorder %s260, %s262
      %p266 = scmp.eq.s32.totalorder %s33, 0
      %p267 = por %p265, %p266
      %p268 = scmp.ne.s32.totalorder %s260, %s262
      %p269 = scmp.eq.s32.totalorder %s38, 2
      %p270 = por %p268, %p269
      %p271 = scmp.ne.s32.totalorder %s262, %s263
      %p272 = scmp.eq.s32.totalorder %s38, 0
      %p273 = por %p271, %p272
      %p274 = scmp.ne.s32.totalorder %s262, %s263
      %p275 = scmp.eq.s32.totalorder %s39, 2
      %p276 = por %p274, %p275
      %p278 = scmp.ne.s32.totalorder %s263, %s277
      %p279 = scmp.eq.s32.totalorder %s39, 0
      %p280 = por %p278, %p279
      %s282 = sadd.s32 %s281, 1
      %p285 = scmp.eq.s32.totalorder %s33, 2
      %p286 = scmp.ne.s32.totalorder %s281, %s283
      %p287 = scmp.eq.s32.totalorder %s33, 0
      %p288 = por %p286, %p287
      %p289 = scmp.ne.s32.totalorder %s281, %s283
      %p290 = scmp.eq.s32.totalorder %s38, 2
      %p291 = por %p289, %p290
      %p292 = scmp.ne.s32.totalorder %s283, %s284
      %p293 = scmp.eq.s32.totalorder %s38, 0
      %p294 = por %p292, %p293
      %p295 = scmp.ne.s32.totalorder %s283, %s284
      %p296 = scmp.eq.s32.totalorder %s39, 2
      %p297 = por %p295, %p296
      %p299 = scmp.ne.s32.totalorder %s284, %s298
      %p300 = scmp.eq.s32.totalorder %s39, 0
      %p301 = por %p299, %p300
      %s303 = sadd.s32 %s302, 1
      %p306 = scmp.eq.s32.totalorder %s33, 2
      %p307 = scmp.ne.s32.totalorder %s302, %s304
      %p308 = scmp.eq.s32.totalorder %s33, 0
      %p309 = por %p307, %p308
      %p310 = scmp.ne.s32.totalorder %s302, %s304
      %p311 = scmp.eq.s32.totalorder %s38, 2
      %p312 = por %p310, %p311
      %p313 = scmp.ne.s32.totalorder %s304, %s305
      %p314 = scmp.eq.s32.totalorder %s38, 0
      %p315 = por %p313, %p314
      %p316 = scmp.ne.s32.totalorder %s304, %s305
      %p317 = scmp.eq.s32.totalorder %s39, 2
      %p318 = por %p316, %p317
      %p320 = scmp.ne.s32.totalorder %s305, %s319
      %p321 = scmp.eq.s32.totalorder %s39, 0
      %p322 = por %p320, %p321
      %s324 = sadd.s32 %s323, 1
      %p327 = scmp.eq.s32.totalorder %s33, 2
      %p328 = scmp.ne.s32.totalorder %s323, %s325
      %p329 = scmp.eq.s32.totalorder %s33, 0
      %p330 = por %p328, %p329
      %p331 = scmp.ne.s32.totalorder %s323, %s325
      %p332 = scmp.eq.s32.totalorder %s38, 2
      %p333 = por %p331, %p332
      %p334 = scmp.ne.s32.totalorder %s325, %s326
      %p335 = scmp.eq.s32.totalorder %s38, 0
      %p336 = por %p334, %p335
      %p337 = scmp.ne.s32.totalorder %s325, %s326
      %p338 = scmp.eq.s32.totalorder %s39, 2
      %p339 = por %p337, %p338
      %p341 = scmp.ne.s32.totalorder %s326, %s340
      %p342 = scmp.eq.s32.totalorder %s39, 0
      %p343 = por %p341, %p342
      %s345 = sadd.s32 %s344, 1
      %p348 = scmp.eq.s32.totalorder %s33, 2
      %p349 = scmp.ne.s32.totalorder %s344, %s346
      %p350 = scmp.eq.s32.totalorder %s33, 0
      %p351 = por %p349, %p350
      %p352 = scmp.ne.s32.totalorder %s344, %s346
      %p353 = scmp.eq.s32.totalorder %s38, 2
      %p354 = por %p352, %p353
      %p355 = scmp.ne.s32.totalorder %s346, %s347
      %p356 = scmp.eq.s32.totalorder %s38, 0
      %p357 = por %p355, %p356
      %p358 = scmp.ne.s32.totalorder %s346, %s347
      %p359 = scmp.eq.s32.totalorder %s39, 2
      %p360 = por %p358, %p359
      %p362 = scmp.ne.s32.totalorder %s347, %s361
      %p363 = scmp.eq.s32.totalorder %s39, 0
      %p364 = por %p362, %p363
      %s365 = ssub.s32 %s40, %s52
      %p366 = scmp.eq.s32.totalorder %s365, 0
      %s368 = sadd.s32 %s367, 1
      %s369 = scalar_select %p366, %s367, %s368
      %p372 = pneg %p366
      %p373 = scmp.eq.s32.totalorder %s33, 2
      %p374 = por %p372, %p373
      %p375 = scmp.ne.s32.totalorder %s367, %s370
      %p376 = scmp.eq.s32.totalorder %s33, 0
      %p377 = por %p375, %p376
      %p378 = scmp.ne.s32.totalorder %s367, %s370
      %p379 = scmp.eq.s32.totalorder %s38, 2
      %p380 = por %p378, %p379
      %p381 = scmp.ne.s32.totalorder %s370, %s371
      %p382 = scmp.eq.s32.totalorder %s38, 0
      %p383 = por %p381, %p382
      %p384 = scmp.ne.s32.totalorder %s370, %s371
      %p385 = scmp.eq.s32.totalorder %s39, 2
      %p386 = por %p384, %p385
      %p388 = scmp.ne.s32.totalorder %s371, %s387
      %p389 = scmp.eq.s32.totalorder %s39, 0
      %p390 = por %p388, %p389
      %p391 = scmp.le.s32.totalorder 1, %s33
      %p392 = scmp.lt.s32.totalorder %s33, 4
      %p393 = pnand %p391, %p392
      %p394 = pneg %p393
      // Predicated region
      $region9: #{tpu_custom_call.1} parent=5 // pred_check
        _
      $region10: #{tpu_custom_call.1} parent=5 // pred_check_branch
        %396 = sbr.rel (%p393) target = $region12
      $region11: #{tpu_custom_call.1} parent=5 // pred_region
        %s397 = ssub.s32 %s33, 1
        // Predicated region
        $region13: #{tpu_custom_call.1} parent=11 // pred_check
          %p398 = pneg %p94
        $region14: #{tpu_custom_call.1} parent=11 // pred_check_branch
          %400 = sbr.rel (%p398) target = $region16
        $region15: #{tpu_custom_call.1} parent=11 // pred_region
          _
        $region16: #{tpu_custom_call.1} parent=11 // pred_fallthru
          _
        // Predicated region
        $region17: #{tpu_custom_call.1} parent=11 // pred_check
          %p401 = pneg %p120
        $region18: #{tpu_custom_call.1} parent=11 // pred_check_branch
          %403 = sbr.rel (%p401) target = $region20
        $region19: #{tpu_custom_call.1} parent=11 // pred_region
          %s404 = smul.u32 2, %s42
          %406 = vsyncadd [#allocation12], 0
          %s407 = smul.addr %s404, 8
          %s408 = scalar_lea.hbm %s3, %s407
          %s409 = sshll.u32 %s408, 4
          %s410 = int_to_ptr.hbm [resolvable:$true] %s409
          %s411 = sshll.u32 [#allocation11], 4
          %s412 = int_to_ptr.vmem [resolvable:$true] %s411
          %417 = dma.hbm_to_vmem [thread:$0]  %s410, 256, %s412, [#allocation12], 128, 128, 8
        $region20: #{tpu_custom_call.1} parent=11 // pred_fallthru
          _
        // Predicated region
        $region21: #{tpu_custom_call.1} parent=11 // pred_check
          %p418 = pneg %p273
        $region22: #{tpu_custom_call.1} parent=11 // pred_check_branch
          %420 = sbr.rel (%p418) target = $region24
        $region23: #{tpu_custom_call.1} parent=11 // pred_region
          _
        $region24: #{tpu_custom_call.1} parent=11 // pred_fallthru
          _
        // Predicated region
        $region25: #{tpu_custom_call.1} parent=11 // pred_check
          %p421 = pneg %p294
        $region26: #{tpu_custom_call.1} parent=11 // pred_check_branch
          %423 = sbr.rel (%p421) target = $region28
        $region27: #{tpu_custom_call.1} parent=11 // pred_region
          _
        $region28: #{tpu_custom_call.1} parent=11 // pred_fallthru
          _
        // Predicated region
        $region29: #{tpu_custom_call.1} parent=11 // pred_check
          %p424 = pneg %p315
        $region30: #{tpu_custom_call.1} parent=11 // pred_check_branch
          %426 = sbr.rel (%p424) target = $region32
        $region31: #{tpu_custom_call.1} parent=11 // pred_region
          _
        $region32: #{tpu_custom_call.1} parent=11 // pred_fallthru
          _
        // Predicated region
        $region33: #{tpu_custom_call.1} parent=11 // pred_check
          %p427 = pneg %p336
        $region34: #{tpu_custom_call.1} parent=11 // pred_check_branch
          %429 = sbr.rel (%p427) target = $region36
        $region35: #{tpu_custom_call.1} parent=11 // pred_region
          _
        $region36: #{tpu_custom_call.1} parent=11 // pred_fallthru
          _
        // Predicated region
        $region37: #{tpu_custom_call.1} parent=11 // pred_check
          %p430 = pneg %p357
        $region38: #{tpu_custom_call.1} parent=11 // pred_check_branch
          %432 = sbr.rel (%p430) target = $region40
        $region39: #{tpu_custom_call.1} parent=11 // pred_region
          _
        $region40: #{tpu_custom_call.1} parent=11 // pred_fallthru
          _
      $region12: #{tpu_custom_call.1} parent=5 // pred_fallthru
        _
      %p433 = scmp.lt.s32.totalorder %s33, 3
      // Predicated region
      $region41: #{tpu_custom_call.1} parent=5 // pred_check
        %p434 = pneg %p433
      $region42: #{tpu_custom_call.1} parent=5 // pred_check_branch
        %436 = sbr.rel (%p434) target = $region44
      $region43: #{tpu_custom_call.1} parent=5 // pred_region
        // Predicated region
        $region45: #{tpu_custom_call.1} parent=43 // pred_check
          %p437 = pneg %p67
        $region46: #{tpu_custom_call.1} parent=43 // pred_check_branch
          %439 = sbr.rel (%p437) target = $region48
        $region47: #{tpu_custom_call.1} parent=43 // pred_region
          %s440 = sand.u32 %s33, 1
          %s441 = scalar_lea.sflag [#allocation9], %s440
          %s442 = sand.u32 %s57, 1
          %s443 = smul.addr %s442, 8
          %s444 = scalar_lea.vmem [#allocation8], %s443
          %s445 = smul.u32 2, %s40
          %447 = vsyncadd %s441, 0
          %s448 = smul.addr %s41, 2
          %s449 = sadd.s32 %s445, %s448
          %s450 = smul.addr %s449, 4
          %s451 = scalar_lea.hbm %s1, %s450
          %s452 = sshll.u32 %s451, 4
          %s453 = int_to_ptr.hbm [resolvable:$true] %s452
          %s454 = sshll.u32 %s444, 4
          %s455 = int_to_ptr.vmem [resolvable:$true] %s454
          %460 = dma.hbm_to_vmem [thread:$0]  %s453, 128, %s455, %s441, 64, 64, 4
        $region48: #{tpu_custom_call.1} parent=43 // pred_fallthru
          _
        // Predicated region
        $region49: #{tpu_custom_call.1} parent=43 // pred_check
          %p461 = pneg %p140
        $region50: #{tpu_custom_call.1} parent=43 // pred_check_branch
          %463 = sbr.rel (%p461) target = $region52
        $region51: #{tpu_custom_call.1} parent=43 // pred_region
          %p464 = scmp.lt.s32.totalorder %s41, 2
          %s465 = scalar_select %p464, %s41, 2
          %s466 = smul.addr %s465, 2
          %s467 = smul.addr %s466, 8
          %s468 = scalar_lea.vmem %s4, %s467
        $region52: #{tpu_custom_call.1} parent=43 // pred_fallthru
          _
        // Predicated region
        $region53: #{tpu_custom_call.1} parent=43 // pred_check
          %p469 = pneg %p168
        $region54: #{tpu_custom_call.1} parent=43 // pred_check_branch
          %471 = sbr.rel (%p469) target = $region56
        $region55: #{tpu_custom_call.1} parent=43 // pred_region
          %s472 = smul.u32 2, %s40
          %p473 = scmp.lt.s32.totalorder %s41, 2
          %s474 = scalar_select %p473, %s41, 2
          %p475 = scmp.lt.s32.totalorder %s472, 1
          %s476 = scalar_select %p475, %s472, 1
          %s477 = smul.addr %s474, 2
          %s478 = sadd.s32 %s476, %s477
          %s479 = smul.addr %s478, 8
          %s480 = scalar_lea.vmem %s5, %s479
          %s481 = smul.u32 2, %s40
        $region56: #{tpu_custom_call.1} parent=43 // pred_fallthru
          _
        // Predicated region
        $region57: #{tpu_custom_call.1} parent=43 // pred_check
          %p482 = pneg %p194
        $region58: #{tpu_custom_call.1} parent=43 // pred_check_branch
          %484 = sbr.rel (%p482) target = $region60
        $region59: #{tpu_custom_call.1} parent=43 // pred_region
          %p485 = scmp.lt.s32.totalorder %s41, 2
          %s486 = scalar_select %p485, %s41, 2
          %s487 = smul.addr %s486, 4
          %s488 = smul.addr %s487, 8
          %s489 = scalar_lea.vmem %s6, %s488
        $region60: #{tpu_custom_call.1} parent=43 // pred_fallthru
          _
        // Predicated region
        $region61: #{tpu_custom_call.1} parent=43 // pred_check
          %p490 = pneg %p220
        $region62: #{tpu_custom_call.1} parent=43 // pred_check_branch
          %492 = sbr.rel (%p490) target = $region64
        $region63: #{tpu_custom_call.1} parent=43 // pred_region
          %s493 = sand.u32 %s33, 1
          %s494 = scalar_lea.sflag [#allocation9], %s493
          %s495 = sand.u32 %s210, 1
          %s496 = smul.addr %s495, 32
          %s497 = scalar_lea.vmem [#allocation13], %s496
          %499 = vsyncadd %s494, 0
          %s500 = smul.addr %s41, 4
          %s501 = smul.addr %s500, 8
          %s502 = scalar_lea.hbm %s7, %s501
          %s503 = sshll.u32 %s502, 4
          %s504 = int_to_ptr.hbm [resolvable:$true] %s503
          %s505 = sshll.u32 %s497, 4
          %s506 = int_to_ptr.vmem [resolvable:$true] %s505
          %511 = dma.hbm_to_vmem [thread:$0]  %s504, 512, %s506, %s494, 128, 128, 8
        $region64: #{tpu_custom_call.1} parent=43 // pred_fallthru
          _
        // Predicated region
        $region65: #{tpu_custom_call.1} parent=43 // pred_check
          %p512 = pneg %p246
        $region66: #{tpu_custom_call.1} parent=43 // pred_check_branch
          %514 = sbr.rel (%p512) target = $region68
        $region67: #{tpu_custom_call.1} parent=43 // pred_region
          %p515 = scmp.lt.s32.totalorder %s41, 2
          %s516 = scalar_select %p515, %s41, 2
          %s517 = scalar_lea.vmem %s8, %s516
        $region68: #{tpu_custom_call.1} parent=43 // pred_fallthru
          _
      $region44: #{tpu_custom_call.1} parent=5 // pred_fallthru
        _
      %p518 = scmp.le.s32.totalorder 1, %s33
      %p519 = scmp.lt.s32.totalorder %s33, 4
      %p520 = pnand %p518, %p519
      %p521 = pneg %p520
      // Predicated region
      $region69: #{tpu_custom_call.1} parent=5 // pred_check
        _
      $region70: #{tpu_custom_call.1} parent=5 // pred_check_branch
        %523 = sbr.rel (%p520) target = $region72
      $region71: #{tpu_custom_call.1} parent=5 // pred_region
        %s524 = ssub.s32 %s33, 1
        %s525 = sand.u32 %s38, 1
        %s526 = scalar_lea.sflag [#allocation9], %s525
        %s527 = sand.u32 %s60, 1
        %s528 = smul.addr %s527, 8
        %s529 = scalar_lea.vmem [#allocation8], %s528
        // Predicated region
        $region73: #{tpu_custom_call.1} parent=71 // pred_check
          %p530 = pneg %p73
        $region74: #{tpu_custom_call.1} parent=71 // pred_check_branch
          %532 = sbr.rel (%p530) target = $region76
        $region75: #{tpu_custom_call.1} parent=71 // pred_region
          %534 = dma.done %s526, 128
        $region76: #{tpu_custom_call.1} parent=71 // pred_fallthru
          _
        // Predicated region
        $region77: #{tpu_custom_call.1} parent=71 // pred_check
          %p535 = pneg %p120
        $region78: #{tpu_custom_call.1} parent=71 // pred_check_branch
          %537 = sbr.rel (%p535) target = $region80
        $region79: #{tpu_custom_call.1} parent=71 // pred_region
          %539 = dma.done [#allocation12], 256
        $region80: #{tpu_custom_call.1} parent=71 // pred_fallthru
          _
        %s540 = sand.u32 %s38, 1
        %s541 = scalar_lea.sflag [#allocation9], %s540
        %s542 = sand.u32 %s213, 1
        %s543 = smul.addr %s542, 32
        %s544 = scalar_lea.vmem [#allocation13], %s543
        // Predicated region
        $region81: #{tpu_custom_call.1} parent=71 // pred_check
          %p545 = pneg %p226
        $region82: #{tpu_custom_call.1} parent=71 // pred_check_branch
          %547 = sbr.rel (%p545) target = $region84
        $region83: #{tpu_custom_call.1} parent=71 // pred_region
          %549 = dma.done %s541, 512
        $region84: #{tpu_custom_call.1} parent=71 // pred_fallthru
          _
        %s550 = sand.u32 %s38, 1
        %s551 = scalar_lea.sflag [#allocation9], %s550
        %s552 = sand.u32 %s60, 1
        %s553 = smul.addr %s552, 8
        %s554 = scalar_lea.vmem [#allocation8], %s553
        %p555 = pneg %p73
        %p556 = pneg %p70
        %p557 = pneg %p94
        %p558 = pneg %p91
        %p559 = pneg %p120
        %p560 = pneg %p117
        %p561 = scmp.lt.s32.totalorder %s43, 2
        %s562 = scalar_select %p561, %s43, 2
        %s563 = smul.addr %s562, 2
        %s564 = smul.addr %s563, 8
        %s565 = scalar_lea.vmem %s4, %s564
        %p566 = pneg %p146
        %p567 = pneg %p143
        %s568 = smul.u32 2, %s42
        %p569 = scmp.lt.s32.totalorder %s43, 2
        %s570 = scalar_select %p569, %s43, 2
        %p571 = scmp.lt.s32.totalorder %s568, 1
        %s572 = scalar_select %p571, %s568, 1
        %s573 = smul.addr %s570, 2
        %s574 = sadd.s32 %s572, %s573
        %s575 = smul.addr %s574, 8
        %s576 = scalar_lea.vmem %s5, %s575
        %p577 = pneg %p174
        %p578 = pneg %p171
        %p579 = scmp.lt.s32.totalorder %s43, 2
        %s580 = scalar_select %p579, %s43, 2
        %s581 = smul.addr %s580, 4
        %s582 = smul.addr %s581, 8
        %s583 = scalar_lea.vmem %s6, %s582
        %p584 = pneg %p200
        %p585 = pneg %p197
        %s586 = sand.u32 %s38, 1
        %s587 = scalar_lea.sflag [#allocation9], %s586
        %s588 = sand.u32 %s213, 1
        %s589 = smul.addr %s588, 32
        %s590 = scalar_lea.vmem [#allocation13], %s589
        %p591 = pneg %p226
        %p592 = pneg %p223
        %p593 = scmp.lt.s32.totalorder %s43, 2
        %s594 = scalar_select %p593, %s43, 2
        %s595 = scalar_lea.vmem %s8, %s594
        %p596 = pneg %p252
        %p597 = pneg %p249
        %p598 = pneg %p273
        %p599 = pneg %p270
        %p600 = pneg %p294
        %p601 = pneg %p291
        %p602 = pneg %p315
        %p603 = pneg %p312
        %p604 = pneg %p336
        %p605 = pneg %p333
        %p606 = pneg %p357
        %p607 = pneg %p354
        %p608 = pneg %p383
        %p609 = pneg %p380
        %s610 = smul.u32 2, %s42
        %s611 = smul.u32 2, %s42
        %p612 = scmp.lt.s32.totalorder %s43, 2
        %s613 = scalar_select %p612, %s43, 2
        %s614 = smul.addr %s613, 2
        %s615 = smul.addr %s614, 8
        %s616 = scalar_lea.vmem %s4, %s615
        %s617 = smul.u32 2, %s42
        %p618 = scmp.lt.s32.totalorder %s43, 2
        %s619 = scalar_select %p618, %s43, 2
        %p620 = scmp.lt.s32.totalorder %s617, 1
        %s621 = scalar_select %p620, %s617, 1
        %s622 = smul.addr %s619, 2
        %s623 = sadd.s32 %s621, %s622
        %s624 = smul.addr %s623, 8
        %s625 = scalar_lea.vmem %s5, %s624
        %s626 = smul.u32 2, %s42
        %p627 = scmp.lt.s32.totalorder %s43, 2
        %s628 = scalar_select %p627, %s43, 2
        %s629 = smul.addr %s628, 4
        %s630 = smul.addr %s629, 8
        %s631 = scalar_lea.vmem %s6, %s630
        %p632 = scmp.lt.s32.totalorder %s43, 2
        %s633 = scalar_select %p632, %s43, 2
        %s634 = scalar_lea.vmem %s8, %s633
        %s635 = smul.u32 2, %s42
        %p636 = scmp.eq.s32.totalorder %s43, 0
        // Predicated region
        $region85: #{tpu_custom_call.1} parent=71 // pred_check
          %p637 = pneg %p636
        $region86: #{tpu_custom_call.1} parent=71 // pred_check_branch
          %639 = sbr.rel (%p637) target = $region88
        $region87: #{tpu_custom_call.1} parent=71 // pred_region
          %vm640 = vcmask 7168
          %641 = vst.msk [vmem:[#allocation3] sm:$0xff] %vm640, -inf
          %642 = vst.msk [vmem:[#allocation3 + $0x8] sm:$0xff] %vm640, -inf
          %643 = vst.msk [vmem:[#allocation4] sm:$0xff] %vm640, 0.0
          %644 = vst.msk [vmem:[#allocation4 + $0x8] sm:$0xff] %vm640, 0.0
          %vm645 = vcmask 261120
          %646 = vst.msk [vmem:[#allocation5] sm:$0xff] %vm645, 0.0
          %647 = vst.msk [vmem:[#allocation5 + $0x8] sm:$0xff] %vm645, 0.0
        $region88: #{tpu_custom_call.1} parent=71 // pred_fallthru
          _
        %s648 = sld [smem:[#allocation7 + %s43]]
        %p649 = scmp.gt.s32.totalorder %s648, 0
        // Predicated region
        $region89: #{tpu_custom_call.1} parent=71 // pred_check
          %p650 = pneg %p649
        $region90: #{tpu_custom_call.1} parent=71 // pred_check_branch
          %652 = sbr.rel (%p650) target = $region92
        $region91: #{tpu_custom_call.1} parent=71 // pred_region
          %v653 = vld [vmem:[%s529] sm:$0xf]
          %v654 = vld [vmem:[%s529 + $0x4] sm:$0xf]
          %v655 = vunpack.c.l.bf16 %v653
          %v656 = vunpack.c.l.bf16 %v654
          %v657 = vld [vmem:[%s2] sm:$0xff]
          %v658 = vld [vmem:[%s2 + $0x8] sm:$0xff]
          %v659 = vld [vmem:[%s616] sm:$0xff]
          %v660 = vld [vmem:[%s616 + $0x8] sm:$0xff]
          %662 = vset.pattern.permute.xlu0 0
          %663 = vperm.xlu0 %662, %v659
          %v664 = vpop.permute.xlu0 %663
          %667 = vset.pattern.permute.xlu0 0
          %668 = vperm.xlu0 %667, %v660
          %v669 = vpop.permute.xlu0 %668
          %v671 = vmul.f32 %v657, %v664
          %v672 = vmul.f32 %v658, %v669
          %vm673 = vcmask 130048
          %v675 = vsel %vm673, %v655, 0
          %v678 = vsel %vm673, %v656, 0
          %680 = vmatpush.msra.mxu0 0.0
          %681 = vmatpush.msra.mxu0 0.0
          %682 = vmatpush.msra.mxu0 0.0
          %683 = vmatpush.msra.mxu0 0.0
          %684 = vmatpush.msra.mxu0 0.0
          %685 = vmatpush.msra.mxu0 0.0
          %686 = vmatpush.msra.mxu0 0.0
          %687 = vmatpush.msra.mxu0 0.0
          %688 = vmatpush.msra.mxu0 0.0
          %689 = vmatpush.msra.mxu0 0.0
          %690 = vmatpush.msra.mxu0 0.0
          %691 = vmatpush.msra.mxu0 0.0
          %692 = vmatpush.msra.mxu0 0.0
          %693 = vmatpush.msra.mxu0 0.0
          %694 = vmatpush.msra.mxu0 %v672
          %695 = vmatpush.msra.mxu0 %v671
          %696 = vmatmul.f32.gmra.mxu0 %v675
          %v697 = vpop.f32.mrf.mxu0
          %v698 = vadd.f32 0.0, %v697
          %699 = vmatmul.f32.gmra.mxu0 %v678
          %v700 = vpop.f32.mrf.mxu0
          %v701 = vadd.f32 0.0, %v700
          %702 = vdwg.mxu0
          %v703 = vld [vmem:[%s625] sm:$0xff]
          %v704 = vld [vmem:[%s625 + $0x8] sm:$0xff]
          %706 = vset.pattern.permute.xlu0 0
          %707 = vperm.xlu0 %706, %v703
          %v708 = vpop.permute.xlu0 %707
          %711 = vset.pattern.permute.xlu0 0
          %712 = vperm.xlu0 %711, %v704
          %v713 = vpop.permute.xlu0 %712
          %v715 = vmul.f32 %v698, %v708
          %v716 = vmul.f32 %v701, %v713
          %v717 = vld [vmem:[%s631] sm:$0xff]
          %v718 = vld [vmem:[%s631 + $0x8] sm:$0xff]
          %v719 = vld [vmem:[%s631 + $0x10] sm:$0xff]
          %v720 = vld [vmem:[%s631 + $0x18] sm:$0xff]
          %v721 = vld [vmem:[#allocation11] sm:$0xff]
          %v722 = vld [vmem:[#allocation11 + $0x8] sm:$0xff]
          %v723 = vld [vmem:[%s544] sm:$0xff]
          %v724 = vld [vmem:[%s544 + $0x8] sm:$0xff]
          %v725 = vld [vmem:[%s544 + $0x10] sm:$0xff]
          %v726 = vld [vmem:[%s544 + $0x18] sm:$0xff]
          %vm727 = vcmask 261120
          %v729 = vsel %vm727, %v721, 0
          %v732 = vsel %vm727, %v722, 0
          %734 = vmatpush.msra.mxu0 0.0
          %735 = vmatpush.msra.mxu0 0.0
          %736 = vmatpush.msra.mxu0 0.0
          %737 = vmatpush.msra.mxu0 0.0
          %738 = vmatpush.msra.mxu0 0.0
          %739 = vmatpush.msra.mxu0 0.0
          %740 = vmatpush.msra.mxu0 0.0
          %741 = vmatpush.msra.mxu0 0.0
          %742 = vmatpush.msra.mxu0 0.0
          %743 = vmatpush.msra.mxu0 0.0
          %744 = vmatpush.msra.mxu0 0.0
          %745 = vmatpush.msra.mxu0 0.0
          %746 = vmatpush.msra.mxu0 %v726
          %747 = vmatpush.msra.mxu0 %v725
          %748 = vmatpush.msra.mxu0 %v724
          %749 = vmatpush.msra.mxu0 %v723
          %750 = vmatmul.f32.gmra.mxu0 %v729
          %v751 = vpop.f32.mrf.mxu0
          %v752 = vadd.f32 0.0, %v751
          %753 = vmatmul.f32.gmra.mxu0 %v732
          %v754 = vpop.f32.mrf.mxu0
          %v755 = vadd.f32 0.0, %v754
          %756 = vdwg.mxu0
          %v758 = vsel %vm727, %v715, 0
          %v761 = vsel %vm727, %v716, 0
          %763 = vmatpush.msra.mxu0 0.0
          %764 = vmatpush.msra.mxu0 0.0
          %765 = vmatpush.msra.mxu0 0.0
          %766 = vmatpush.msra.mxu0 0.0
          %767 = vmatpush.msra.mxu0 0.0
          %768 = vmatpush.msra.mxu0 0.0
          %769 = vmatpush.msra.mxu0 0.0
          %770 = vmatpush.msra.mxu0 0.0
          %771 = vmatpush.msra.mxu0 0.0
          %772 = vmatpush.msra.mxu0 0.0
          %773 = vmatpush.msra.mxu0 0.0
          %774 = vmatpush.msra.mxu0 0.0
          %775 = vmatpush.msra.mxu0 %v720
          %776 = vmatpush.msra.mxu0 %v719
          %777 = vmatpush.msra.mxu0 %v718
          %778 = vmatpush.msra.mxu0 %v717
          %779 = vmatmul.f32.gmra.mxu0 %v758
          %v780 = vpop.f32.mrf.mxu0
          %v781 = vadd.f32 %v752, %v780
          %782 = vmatmul.f32.gmra.mxu0 %v761
          %v783 = vpop.f32.mrf.mxu0
          %v784 = vadd.f32 %v755, %v783
          %785 = vdwg.mxu0
          %v786 = vld [vmem:[%s634] sm:$0x1]
          %v788 = vperm.slane %v786, 0
          %v790 = vadd.f32 %v781, %v788
          %v791 = vadd.f32 %v784, %v788
          %792 = vst.msk [vmem:[#allocation2] sm:$0xff] %vm727, %v790
          %793 = vst.msk [vmem:[#allocation2 + $0x8] sm:$0xff] %vm727, %v791
        $region92: #{tpu_custom_call.1} parent=71 // pred_fallthru
          _
        %p794 = scmp.le.s32.totalorder %s648, 0
        // Predicated region
        $region93: #{tpu_custom_call.1} parent=71 // pred_check
          %p795 = pneg %p794
        $region94: #{tpu_custom_call.1} parent=71 // pred_check_branch
          %797 = sbr.rel (%p795) target = $region96
        $region95: #{tpu_custom_call.1} parent=71 // pred_region
          %v798 = vld [vmem:[#allocation11] sm:$0xff]
          %v799 = vld [vmem:[#allocation11 + $0x8] sm:$0xff]
          %v800 = vld [vmem:[%s9] sm:$0xff]
          %v801 = vld [vmem:[%s9 + $0x8] sm:$0xff]
          %v802 = vld [vmem:[%s9 + $0x10] sm:$0xff]
          %v803 = vld [vmem:[%s9 + $0x18] sm:$0xff]
          %v804 = vld [vmem:[%s10] sm:$0x1]
          %v806 = vperm.slane %v804, 0
          %vm808 = vcmask 261120
          %v810 = vsel %vm808, %v798, 0
          %v813 = vsel %vm808, %v799, 0
          %815 = vmatpush.msra.mxu0 0.0
          %816 = vmatpush.msra.mxu0 0.0
          %817 = vmatpush.msra.mxu0 0.0
          %818 = vmatpush.msra.mxu0 0.0
          %819 = vmatpush.msra.mxu0 0.0
          %820 = vmatpush.msra.mxu0 0.0
          %821 = vmatpush.msra.mxu0 0.0
          %822 = vmatpush.msra.mxu0 0.0
          %823 = vmatpush.msra.mxu0 0.0
          %824 = vmatpush.msra.mxu0 0.0
          %825 = vmatpush.msra.mxu0 0.0
          %826 = vmatpush.msra.mxu0 0.0
          %827 = vmatpush.msra.mxu0 %v803
          %828 = vmatpush.msra.mxu0 %v802
          %829 = vmatpush.msra.mxu0 %v801
          %830 = vmatpush.msra.mxu0 %v800
          %831 = vmatmul.f32.gmra.mxu0 %v810
          %v832 = vpop.f32.mrf.mxu0
          %v833 = vadd.f32 %v806, %v832
          %834 = vmatmul.f32.gmra.mxu0 %v813
          %v835 = vpop.f32.mrf.mxu0
          %v836 = vadd.f32 %v806, %v835
          %837 = vdwg.mxu0
          %838 = vst.msk [vmem:[#allocation2] sm:$0xff] %vm808, %v833
          %839 = vst.msk [vmem:[#allocation2 + $0x8] sm:$0xff] %vm808, %v836
        $region96: #{tpu_custom_call.1} parent=71 // pred_fallthru
          _
        %v840 = vld [vmem:[#allocation2] sm:$0xff]
        %v841 = vld [vmem:[#allocation2 + $0x8] sm:$0xff]
        %v842 = vld [vmem:[%s11] sm:$0xff]
        %v843 = vld [vmem:[%s11 + $0x8] sm:$0xff]
        %v844 = vld [vmem:[%s11 + $0x10] sm:$0xff]
        %v845 = vld [vmem:[%s11 + $0x18] sm:$0xff]
        %v846 = vld [vmem:[%s12] sm:$0x1]
        %v848 = vperm.slane %v846, 0
        %vm850 = vcmask 261120
        %v852 = vsel %vm850, %v840, 0
        %v855 = vsel %vm850, %v841, 0
        %857 = vmatpush.msra.mxu0 0.0
        %858 = vmatpush.msra.mxu0 0.0
        %859 = vmatpush.msra.mxu0 0.0
        %860 = vmatpush.msra.mxu0 0.0
        %861 = vmatpush.msra.mxu0 0.0
        %862 = vmatpush.msra.mxu0 0.0
        %863 = vmatpush.msra.mxu0 0.0
        %864 = vmatpush.msra.mxu0 0.0
        %865 = vmatpush.msra.mxu0 0.0
        %866 = vmatpush.msra.mxu0 0.0
        %867 = vmatpush.msra.mxu0 0.0
        %868 = vmatpush.msra.mxu0 0.0
        %869 = vmatpush.msra.mxu0 %v845
        %870 = vmatpush.msra.mxu0 %v844
        %871 = vmatpush.msra.mxu0 %v843
        %872 = vmatpush.msra.mxu0 %v842
        %873 = vmatmul.f32.gmra.mxu0 %v852
        %v874 = vpop.f32.mrf.mxu0
        %v875 = vadd.f32 %v848, %v874
        %876 = vmatmul.f32.gmra.mxu0 %v855
        %v877 = vpop.f32.mrf.mxu0
        %v878 = vadd.f32 %v848, %v877
        %879 = vdwg.mxu0
        %v880 = vtanh.pop %v875
        %v881 = vtanh.pop %v878
        %v882 = vld [vmem:[%s13] sm:$0x1]
        %v884 = vperm.slane %v882, 0
        %v886 = vmul.f32 %v880, %v884
        %v887 = vmul.f32 %v881, %v884
        %vm888 = vcmask 130048
        %v889 = vsel %vm888, %v886, 0.0
        %890 = vadd.xlane.f32.xlu0 %v889
        %v891 = vpop.xlane.xlu0 %890
        %v892 = vsel %vm888, %v887, 0.0
        %893 = vadd.xlane.f32.xlu0 %v892
        %v894 = vpop.xlane.xlu0 %893
        %v895 = vld [vmem:[#allocation3] sm:$0xff]
        %v896 = vld [vmem:[#allocation3 + $0x8] sm:$0xff]
        %v897 = vmax.f32 %v895, %v891
        %v898 = vmax.f32 %v896, %v894
        %v899 = vsub.f32 %v895, %v897
        %v900 = vsub.f32 %v896, %v898
        %v901 = vmul.f32 %v899, 1.442695
        %v902 = vpow.pop %v901
        %v903 = vmul.f32 %v900, 1.442695
        %v904 = vpow.pop %v903
        %v905 = vsub.f32 %v891, %v897
        %v906 = vsub.f32 %v894, %v898
        %v907 = vmul.f32 %v905, 1.442695
        %v908 = vpow.pop %v907
        %v909 = vmul.f32 %v906, 1.442695
        %v910 = vpow.pop %v909
        %v911 = vld [vmem:[#allocation4] sm:$0xff]
        %v912 = vld [vmem:[#allocation4 + $0x8] sm:$0xff]
        %v913 = vmul.f32 %v902, %v911
        %v914 = vmul.f32 %v904, %v912
        %v915 = vadd.f32 %v913, %v908
        %v916 = vadd.f32 %v914, %v910
        %vm917 = vcmask 7168
        %918 = vst.msk [vmem:[#allocation4] sm:$0xff] %vm917, %v915
        %919 = vst.msk [vmem:[#allocation4 + $0x8] sm:$0xff] %vm917, %v916
        %v920 = vld [vmem:[#allocation5] sm:$0xff]
        %v921 = vld [vmem:[#allocation5 + $0x8] sm:$0xff]
        %923 = vset.pattern.permute.xlu0 0
        %924 = vperm.xlu0 %923, %v902
        %v925 = vpop.permute.xlu0 %924
        %928 = vset.pattern.permute.xlu0 0
        %929 = vperm.xlu0 %928, %v904
        %v930 = vpop.permute.xlu0 %929
        %v932 = vmul.f32 %v925, %v920
        %v933 = vmul.f32 %v930, %v921
        %935 = vset.pattern.permute.xlu0 0
        %936 = vperm.xlu0 %935, %v908
        %v937 = vpop.permute.xlu0 %936
        %940 = vset.pattern.permute.xlu0 0
        %941 = vperm.xlu0 %940, %v910
        %v942 = vpop.permute.xlu0 %941
        %v944 = vmul.f32 %v937, %v840
        %v945 = vmul.f32 %v942, %v841
        %v946 = vadd.f32 %v932, %v944
        %v947 = vadd.f32 %v933, %v945
        %948 = vst.msk [vmem:[#allocation5] sm:$0xff] %vm850, %v946
        %949 = vst.msk [vmem:[#allocation5 + $0x8] sm:$0xff] %vm850, %v947
        %950 = vst.msk [vmem:[#allocation3] sm:$0xff] %vm917, %v897
        %951 = vst.msk [vmem:[#allocation3 + $0x8] sm:$0xff] %vm917, %v898
        %p952 = scmp.eq.s32.totalorder %s43, 2
        // Predicated region
        $region97: #{tpu_custom_call.1} parent=71 // pred_check
          %p953 = pneg %p952
        $region98: #{tpu_custom_call.1} parent=71 // pred_check_branch
          %955 = sbr.rel (%p953) target = $region100
        $region99: #{tpu_custom_call.1} parent=71 // pred_region
          %v956 = vld [vmem:[#allocation5] sm:$0xff]
          %v957 = vld [vmem:[#allocation5 + $0x8] sm:$0xff]
          %v958 = vld [vmem:[#allocation4] sm:$0xff]
          %v959 = vld [vmem:[#allocation4 + $0x8] sm:$0xff]
          %961 = vset.pattern.permute.xlu0 0
          %962 = vperm.xlu0 %961, %v958
          %v963 = vpop.permute.xlu0 %962
          %966 = vset.pattern.permute.xlu0 0
          %967 = vperm.xlu0 %966, %v959
          %v968 = vpop.permute.xlu0 %967
          %v970 = vrcp.pop %v963
          %v971 = vmul.f32 %v963, %v970
          %v972 = vsub.f32 1.0, %v971
          %v973 = vmul.f32 %v970, %v972
          %v974 = vadd.f32 %v970, %v973
          %vm975 = vweird.f32 %v963
          %vm976 = vweird.f32 %v970
          %vm977 = vmor %vm975, %vm976
          %v978 = vsel %vm977, %v970, %v974
          %v979 = vand.u32 2147483647, %v963
          %vm980 = vcmp.eq.f32.partialorder %v979, 8.507059e+37
          %v981 = vand.u32 %v963, 2147483648
          %v982 = vor.u32 1.1754944e-38, %v981
          %v983 = vsel %vm980, %v982, %v978
          %v984 = vmul.f32 %v956, %v983
          %v985 = vrcp.pop %v968
          %v986 = vmul.f32 %v968, %v985
          %v987 = vsub.f32 1.0, %v986
          %v988 = vmul.f32 %v985, %v987
          %v989 = vadd.f32 %v985, %v988
          %vm990 = vweird.f32 %v968
          %vm991 = vweird.f32 %v985
          %vm992 = vmor %vm990, %vm991
          %v993 = vsel %vm992, %v985, %v989
          %v994 = vand.u32 2147483647, %v968
          %vm995 = vcmp.eq.f32.partialorder %v994, 8.507059e+37
          %v996 = vand.u32 %v968, 2147483648
          %v997 = vor.u32 1.1754944e-38, %v996
          %v998 = vsel %vm995, %v997, %v993
          %v999 = vmul.f32 %v957, %v998
          %1000 = vst.msk [vmem:[#allocation14] sm:$0xff] %vm850, %v984
          %1001 = vst.msk [vmem:[#allocation14 + $0x8] sm:$0xff] %vm850, %v999
        $region100: #{tpu_custom_call.1} parent=71 // pred_fallthru
          _
        // Predicated region
        $region101: #{tpu_custom_call.1} parent=71 // pred_check
          %p1002 = pneg %p380
        $region102: #{tpu_custom_call.1} parent=71 // pred_check_branch
          %1004 = sbr.rel (%p1002) target = $region104
        $region103: #{tpu_custom_call.1} parent=71 // pred_region
          %s1005 = smul.u32 2, %s42
          %1007 = vsyncadd [#allocation10], 0
          %s1008 = smul.addr %s1005, 8
          %s1009 = scalar_lea.hbm %s14, %s1008
          %s1010 = sshll.u32 [#allocation14], 4
          %s1011 = int_to_ptr.vmem [resolvable:$true] %s1010
          %s1012 = sshll.u32 %s1009, 4
          %s1013 = int_to_ptr.hbm [resolvable:$true] %s1012
          %1018 = dma.vmem_to_hbm [thread:$0]  %s1011, 256, %s1013, [#allocation10], 128, 128, 8
        $region104: #{tpu_custom_call.1} parent=71 // pred_fallthru
          _
        // Predicated region
        $region105: #{tpu_custom_call.1} parent=71 // pred_check
          %p1019 = pneg %p380
        $region106: #{tpu_custom_call.1} parent=71 // pred_check_branch
          %1021 = sbr.rel (%p1019) target = $region108
        $region107: #{tpu_custom_call.1} parent=71 // pred_region
          %1023 = dma.done [#allocation10], 256
        $region108: #{tpu_custom_call.1} parent=71 // pred_fallthru
          _
      $region72: #{tpu_custom_call.1} parent=5 // pred_fallthru
        _
      %p1024 = scmp.le.s32.totalorder 2, %s33
      // Predicated region
      $region109: #{tpu_custom_call.1} parent=5 // pred_check
        %p1025 = pneg %p1024
      $region110: #{tpu_custom_call.1} parent=5 // pred_check_branch
        %1027 = sbr.rel (%p1025) target = $region112
      $region111: #{tpu_custom_call.1} parent=5 // pred_region
        %s1028 = ssub.s32 %s33, 2
      $region112: #{tpu_custom_call.1} parent=5 // pred_fallthru
        _
    $region6: #{tpu_custom_call.1} parent=1 // loop_footer
      %s37 = sadd.s32 1, %s33
    $region7: #{tpu_custom_call.1} parent=1 // loop_footer_branch
      %32 = sbr.rel target = $region3
    $region8: #{tpu_custom_call.1} parent=1 // loop_exit
      _
    %1029 = vsyncpa [#allocation9], 1
    %s1030 = scalar_lea.sflag [#allocation9], 1
    %1031 = vsyncpa %s1030, 1
    %1032 = vsyncpa [#allocation12], 1
    %1033 = vsyncpa [#allocation10], 1
    %s1034 = scalar_lea.sflag [#allocation10], 1
    %1035 = vsyncpa %s1034, 1

</llo_original>
